<compile_context>
chip_gen: v7x
topology: tpu7x:2x2x1
jax: 0.10.0
libtpu: 0.0.40
codegen_flags: <defaults>
</compile_context>

<pallas_src>
import functools
import math

import jax
import jax.numpy as jnp
import numpy as np
from jax import lax
from jax.experimental import pallas as pl
from jax.experimental.pallas import tpu as pltpu

_LANE = 128


def _round_up(x, m):
    return ((x + m - 1) // m) * m


@functools.lru_cache(maxsize=None)
def _vmem_limit_bytes():
    """Generation-aware scoped-VMEM limit (v7x has 64 MiB physical, v5e/v6e 128)."""
    cap = 128 * 1024 * 1024
    try:
        info = pltpu.get_tpu_info()
        cap = int(getattr(info, "vmem_capacity_bytes", cap))
    except Exception:
        pass
    if cap <= 64 * 1024 * 1024:
        return 44 * 1024 * 1024    # v7x: leave headroom under 64 MiB physical
    return 100 * 1024 * 1024       # v5e / v6e: 128 MiB physical


# -----------------------------------------------------------------------------
# Parameter preparation: pad channels / vocab to lane width ONCE, cast to bf16.
# -----------------------------------------------------------------------------
def prepare_params(emb, layers, *, kernel_size):
    """emb: (V, C) f32; layers: list of (w (K, C, C), b (C,)) f32.

    Returns lane-padded bf16 weights/embedding (padding is exact: padded
    channels stay identically zero through conv+bias+residual; padded vocab
    columns produce exactly-zero logits).
    """
    V, C = emb.shape
    Cp = _round_up(C, _LANE)
    Vp = _round_up(V, _LANE)
    K = kernel_size
    assert K % 2 == 1, "even kernel_size changes the output length in the PyTorch model"

    emb_bf = emb.astype(jnp.bfloat16)
    # (Vp, Cp) for the embedding gather, (Cp, Vp) pre-transposed for the lm_head
    emb_p = jnp.zeros((Vp, Cp), jnp.bfloat16).at[:V, :C].set(emb_bf)
    emb_t = jnp.zeros((Cp, Vp), jnp.bfloat16).at[:C, :V].set(emb_bf.T)

    w_list, b_list = [], []
    for (w, b) in layers:
        assert w.shape == (K, C, C), w.shape          # fused kernel needs Cin == Cout
        wp = jnp.zeros((K, Cp, Cp), jnp.bfloat16).at[:, :C, :C].set(w.astype(jnp.bfloat16))
        w_list.append(wp)
        b_list.append(jnp.zeros((Cp,), jnp.float32).at[:C].set(b.astype(jnp.float32)))
    w_all = jnp.stack(w_list)                         # (L, K, Cp, Cp) bf16
    b_all = jnp.stack(b_list)[:, None, :]             # (L, 1, Cp)    f32
    return {"emb_p": emb_p, "emb_t": emb_t, "w_all": w_all, "b_all": b_all,
            "V": V, "C": C}


# -----------------------------------------------------------------------------
# Pallas kernel: fused conv stack (all layers, residual, VMEM-resident activation)
# -----------------------------------------------------------------------------
def _conv_stack_kernel(x_ref, w_ref, b_ref, o_ref, buf_ref, *,
                       num_layers, kernel_size, dilation, residual, start, pad):
    # x_ref  : (1, S, Cp) bf16       activation for this batch element
    # w_ref  : (L, K, Cp, Cp) bf16   all layer weights (resident; tiny vs activation)
    # b_ref  : (L, 1, Cp) f32
    # o_ref  : (1, S, Cp) bf16
    # buf_ref: (A + S + A, Cp) f32   VMEM scratch; live window at 8-aligned row A
    S = o_ref.shape[1]
    Cp = o_ref.shape[2]
    K = kernel_size
    A = start

    # Zero only the pad rows that the tap reads can touch (once per grid step).
    if pad > 0:
        zeros = jnp.zeros((pad, Cp), jnp.float32)
        buf_ref[A - pad:A, :] = zeros
        buf_ref[A + S:A + S + pad, :] = zeros
    # Dominant store is sublane-aligned (row A is a multiple of 8).
    buf_ref[A:A + S, :] = x_ref[0].astype(jnp.float32)

    for l in range(num_layers):          # static unroll; weights are co-resident
        center = buf_ref[A:A + S, :]     # aligned read; also the residual input
        y = None
        for k in range(K):               # K shallow MXU matmuls, f32 accumulation
            off = A + k * dilation - pad
            tap = center if off == A else buf_ref[off:off + S, :]
            contrib = jnp.dot(tap.astype(jnp.bfloat16), w_ref[l, k],
                              preferred_element_type=jnp.float32)   # (S, Cp)
            y = contrib if y is None else y + contrib
        y = y + b_ref[l]                 # (1, Cp) f32 bias broadcast
        if residual:
            y = y + center               # residual path stays f32 across layers
        if l + 1 < num_layers:
            buf_ref[A:A + S, :] = y      # stays in VMEM; pad rows remain zero
        else:
            o_ref[0] = y.astype(o_ref.dtype)


def conv_stack(x, w_all, b_all, *, kernel_size, dilation, residual=True):
    """x: (B, S, Cp) lane-padded channel-last bf16 activation -> (B, S, Cp) bf16."""
    B, S, Cp = x.shape
    L, K, Cp_w, _ = w_all.shape
    assert K == kernel_size and K % 2 == 1 and Cp_w == Cp and L >= 1
    pad = (K // 2) * dilation
    A = _round_up(pad, 8) if pad > 0 else 0   # 8-sublane-aligned live window
    rows = A + S + max(A, pad)

    kern = functools.partial(_conv_stack_kernel, num_layers=L, kernel_size=K,
                             dilation=dilation, residual=residual,
                             start=A, pad=pad)
    return pl.pallas_call(
        kern,
        out_shape=jax.ShapeDtypeStruct((B, S, Cp), jnp.bfloat16),
        grid=(B,),
        in_specs=[
            pl.BlockSpec((1, S, Cp), lambda b: (b, 0, 0)),
            pl.BlockSpec((L, K, Cp, Cp), lambda b: (0, 0, 0, 0)),
            pl.BlockSpec((L, 1, Cp), lambda b: (0, 0, 0)),
        ],
        out_specs=pl.BlockSpec((1, S, Cp), lambda b: (b, 0, 0)),
        scratch_shapes=[pltpu.VMEM((rows, Cp), jnp.float32)],
        compiler_params=pltpu.CompilerParams(
            dimension_semantics=("parallel",),
            vmem_limit_bytes=_vmem_limit_bytes()),
    )(x, w_all, b_all)


# -----------------------------------------------------------------------------
# Pallas kernel: tied-weight lm_head, tiled over (B*S, Vp), pre-transposed emb
# -----------------------------------------------------------------------------
def _lm_head_kernel(x_ref, e_ref, o_ref):
    # x_ref: (tm, Cp) bf16, e_ref: (Cp, tn) bf16 -> o_ref: (tm, tn) bf16 (f32 acc)
    o_ref[...] = jnp.dot(x_ref[...], e_ref[...],
                         preferred_element_type=jnp.float32).astype(o_ref.dtype)


def lm_head(x, emb_t, *, tm=1024, tn=1024):
    """x: (B, S, Cp) bf16; emb_t: (Cp, Vp) bf16 pre-transposed table -> bf16 (B, S, Vp)."""
    B, S, Cp = x.shape
    Vp = emb_t.shape[1]
    M = B * S
    x2 = x.reshape(M, Cp)
    tm = min(tm, M)          # full dim if smaller than the tile (legal block)
    tn = min(tn, Vp)         # Vp is a multiple of 128, so tn stays lane-dense
    grid = (pl.cdiv(M, tm), pl.cdiv(Vp, tn))   # j inner: x tile resident across j
    out = pl.pallas_call(
        _lm_head_kernel,
        out_shape=jax.ShapeDtypeStruct((M, Vp), jnp.bfloat16),
        grid=grid,
        in_specs=[
            pl.BlockSpec((tm, Cp), lambda i, j: (i, 0)),
            pl.BlockSpec((Cp, tn), lambda i, j: (0, j)),
        ],
        out_specs=pl.BlockSpec((tm, tn), lambda i, j: (i, j)),
        compiler_params=pltpu.CompilerParams(
            dimension_semantics=("parallel", "parallel"),
            vmem_limit_bytes=_vmem_limit_bytes()),
    )(x2, emb_t)
    return out.reshape(B, S, Vp)


# -----------------------------------------------------------------------------
# Full ConvTextModel forward (glue: embedding gather; padded-vocab logits out)
# -----------------------------------------------------------------------------
def conv_text_model_forward(input_ids, prepared, *, kernel_size, dilation):
    emb_p = prepared["emb_p"]
    x = emb_p[input_ids]                                  # (B, S, Cp) bf16 gather (glue)
    x = conv_stack(x, prepared["w_all"], prepared["b_all"],
                   kernel_size=kernel_size, dilation=dilation, residual=True)
    # Returns PADDED (B, S, Vp) bf16 logits; columns >= prepared["V"] are exactly
    # zero.  Consumers should mask/ignore those lanes instead of slicing (a slice
    # to a non-128-multiple forces a full extra relayout pass over the logits).
    return lm_head(x, prepared["emb_t"])


# -----------------------------------------------------------------------------
# Pure-JAX reference (mimics the PyTorch NCW computation exactly, f32, unpadded)
# -----------------------------------------------------------------------------
def reference_forward(input_ids, emb, layers, *, kernel_size, dilation):
    x = emb[input_ids]                                    # (B, S, C)
    x = jnp.transpose(x, (0, 2, 1))                       # (B, C, S)  NCW like PyTorch
    pad = int(math.floor(kernel_size / 2)) * dilation
    for (w, b) in layers:
        w_pt = jnp.transpose(w, (2, 1, 0))                # (Cout, Cin, K) PyTorch layout
        y = lax.conv_general_dilated(
            x, w_pt, window_strides=(1,), padding=[(pad, pad)],
            rhs_dilation=(dilation,),
            dimension_numbers=("NCH", "OIH", "NCH"))
        y = y + b[None, :, None]
        x = y + x                                         # residual
    x = jnp.transpose(x, (0, 2, 1))                       # (B, S, C)
    return x @ emb.T                                      # tied lm_head


# TODO(synk): attention branches (num_attention_heads>0), norm layers, residual_map
#             and pos_embedding are disabled by the module defaults and are not
#             implemented here; untied lm_head (ch != num_channels) likewise.


if __name__ == "__main__":
    # Small, module-consistent shapes.
    vocab_size = 32
    num_layers = 2
    num_channels = 32
    kernel_size = 3
    dilation = 1
    batch = 2
    seq = 16

    key = jax.random.PRNGKey(0)
    k_emb, k_ids, *k_layers = jax.random.split(key, 2 + 2 * num_layers)

    # Deterministic synthetic parameters (shapes from the module's __init__).
    emb = jax.random.normal(k_emb, (vocab_size, num_channels), jnp.float32) * 0.1
    layers = []
    bound = 1.0 / math.sqrt(num_channels * kernel_size)
    for li in range(num_layers):
        kw, kb = k_layers[2 * li], k_layers[2 * li + 1]
        # stored as (K, Cin, Cout) for the channel-last kernel
        w = jax.random.uniform(kw, (kernel_size, num_channels, num_channels),
                               jnp.float32, minval=-bound, maxval=bound)
        b = jax.random.uniform(kb, (num_channels,), jnp.float32,
                               minval=-bound, maxval=bound)
        layers.append((w, b))

    input_ids = jax.random.randint(k_ids, (batch, seq), 0, vocab_size)

    prepared = prepare_params(emb, layers, kernel_size=kernel_size)
    logits_padded = conv_text_model_forward(input_ids, prepared,
                                            kernel_size=kernel_size,
                                            dilation=dilation)
    logits_padded = jax.block_until_ready(logits_padded)

    ref = reference_forward(input_ids, emb, layers,
                            kernel_size=kernel_size, dilation=dilation)
    ref = jax.block_until_ready(ref)

    Vp = prepared["emb_p"].shape[0]
    assert logits_padded.shape == (batch, seq, Vp), logits_padded.shape
    # Compare the real-vocab lanes (bf16 kernel vs f32 reference -> loose tol).
    logits = np.asarray(logits_padded[..., :vocab_size].astype(jnp.float32))
    np.testing.assert_allclose(logits, np.asarray(ref), rtol=5e-2, atol=1e-2)
    print("KERNEL_OK")
</pallas_src>

<mosaic_0001>
module attributes {stable_mosaic.version = 11 : i64} {
  func.func @_conv_stack_kernel(%arg0: i32, %arg1: memref<1x16x128xbf16, #tpu.memory_space<vmem>>, %arg2: memref<2x3x128x128xbf16, #tpu.memory_space<vmem>>, %arg3: memref<2x1x128xf32, #tpu.memory_space<vmem>>, %arg4: memref<1x16x128xbf16, #tpu.memory_space<vmem>>, %arg5: memref<32x128xf32, #tpu.memory_space<vmem>>) attributes {dimension_semantics = [#tpu.dimension_semantics<parallel>], iteration_bounds = array<i64: 2>, scalar_prefetch = 0 : i64, scratch_operands = 1 : i64, tpu.core_type = #tpu.core_type<tc>, window_params = [{transform_indices = @transform_0, window_bounds = array<i64: 1, 16, 128>}, {pipeline_mode = #tpu.pipeline_mode<synchronous>, transform_indices = @transform_1, window_bounds = array<i64: 2, 3, 128, 128>}, {pipeline_mode = #tpu.pipeline_mode<synchronous>, transform_indices = @transform_2, window_bounds = array<i64: 2, 1, 128>}, {transform_indices = @transform_3, window_bounds = array<i64: 1, 16, 128>}]} {
    %cst = arith.constant 0.000000e+00 : f32
    %0 = vector.broadcast %cst : f32 to vector<1x128xf32>
    %c7 = arith.constant 7 : index
    %c0 = arith.constant 0 : index
    %1 = vector.load %arg5[%c7, %c0] : memref<32x128xf32, #tpu.memory_space<vmem>>, vector<1x128xf32>
    tpu.vector_store %arg5[%c7, %c0], %0 {strides = array<i32>} : memref<32x128xf32, #tpu.memory_space<vmem>>, vector<1x128xf32>,
    %c24 = arith.constant 24 : index
    %c0_0 = arith.constant 0 : index
    %2 = vector.load %arg5[%c24, %c0_0] : memref<32x128xf32, #tpu.memory_space<vmem>>, vector<1x128xf32>
    tpu.vector_store %arg5[%c24, %c0_0], %0 {strides = array<i32>} : memref<32x128xf32, #tpu.memory_space<vmem>>, vector<1x128xf32>,
    %c0_1 = arith.constant 0 : index
    %c0_2 = arith.constant 0 : index
    %c0_3 = arith.constant 0 : index
    %3 = vector.load %arg1[%c0_1, %c0_2, %c0_3] : memref<1x16x128xbf16, #tpu.memory_space<vmem>>, vector<1x16x128xbf16>
    %4 = vector.shape_cast %3 : vector<1x16x128xbf16> to vector<16x128xbf16>
    %5 = arith.extf %4 : vector<16x128xbf16> to vector<16x128xf32>
    %c8 = arith.constant 8 : index
    %c0_4 = arith.constant 0 : index
    %6 = vector.load %arg5[%c8, %c0_4] : memref<32x128xf32, #tpu.memory_space<vmem>>, vector<16x128xf32>
    tpu.vector_store %arg5[%c8, %c0_4], %5 {strides = array<i32>} : memref<32x128xf32, #tpu.memory_space<vmem>>, vector<16x128xf32>,
    %c8_5 = arith.constant 8 : index
    %c0_6 = arith.constant 0 : index
    %7 = vector.load %arg5[%c8_5, %c0_6] : memref<32x128xf32, #tpu.memory_space<vmem>>, vector<16x128xf32>
    %c7_7 = arith.constant 7 : index
    %c0_8 = arith.constant 0 : index
    %8 = vector.load %arg5[%c7_7, %c0_8] : memref<32x128xf32, #tpu.memory_space<vmem>>, vector<16x128xf32>
    %9 = arith.truncf %8 : vector<16x128xf32> to vector<16x128xbf16>
    %c0_9 = arith.constant 0 : index
    %c0_10 = arith.constant 0 : index
    %c0_11 = arith.constant 0 : index
    %c0_12 = arith.constant 0 : index
    %10 = vector.load %arg2[%c0_9, %c0_10, %c0_11, %c0_12] : memref<2x3x128x128xbf16, #tpu.memory_space<vmem>>, vector<1x1x128x128xbf16>
    %11 = vector.shape_cast %10 : vector<1x1x128x128xbf16> to vector<128x128xbf16>
    %cst_13 = arith.constant dense<0.000000e+00> : vector<16x128xf32>
    %12 = tpu.matmul %9, %11, %cst_13 {dimension_numbers = #tpu.dot_dimension_numbers<[1], [0], [0], [1], [0, 0, 1, 1], [], []>} : vector<16x128xbf16>, vector<128x128xbf16>, vector<16x128xf32> -> vector<16x128xf32>
    %13 = arith.truncf %7 : vector<16x128xf32> to vector<16x128xbf16>
    %c0_14 = arith.constant 0 : index
    %c1 = arith.constant 1 : index
    %c0_15 = arith.constant 0 : index
    %c0_16 = arith.constant 0 : index
    %14 = vector.load %arg2[%c0_14, %c1, %c0_15, %c0_16] : memref<2x3x128x128xbf16, #tpu.memory_space<vmem>>, vector<1x1x128x128xbf16>
    %15 = vector.shape_cast %14 : vector<1x1x128x128xbf16> to vector<128x128xbf16>
    %cst_17 = arith.constant dense<0.000000e+00> : vector<16x128xf32>
    %16 = tpu.matmul %13, %15, %cst_17 {dimension_numbers = #tpu.dot_dimension_numbers<[1], [0], [0], [1], [0, 0, 1, 1], [], []>} : vector<16x128xbf16>, vector<128x128xbf16>, vector<16x128xf32> -> vector<16x128xf32>
    %17 = arith.addf %12, %16 : vector<16x128xf32>
    %c9 = arith.constant 9 : index
    %c0_18 = arith.constant 0 : index
    %18 = vector.load %arg5[%c9, %c0_18] : memref<32x128xf32, #tpu.memory_space<vmem>>, vector<16x128xf32>
    %19 = arith.truncf %18 : vector<16x128xf32> to vector<16x128xbf16>
    %c0_19 = arith.constant 0 : index
    %c2 = arith.constant 2 : index
    %c0_20 = arith.constant 0 : index
    %c0_21 = arith.constant 0 : index
    %20 = vector.load %arg2[%c0_19, %c2, %c0_20, %c0_21] : memref<2x3x128x128xbf16, #tpu.memory_space<vmem>>, vector<1x1x128x128xbf16>
    %21 = vector.shape_cast %20 : vector<1x1x128x128xbf16> to vector<128x128xbf16>
    %cst_22 = arith.constant dense<0.000000e+00> : vector<16x128xf32>
    %22 = tpu.matmul %19, %21, %cst_22 {dimension_numbers = #tpu.dot_dimension_numbers<[1], [0], [0], [1], [0, 0, 1, 1], [], []>} : vector<16x128xbf16>, vector<128x128xbf16>, vector<16x128xf32> -> vector<16x128xf32>
    %23 = arith.addf %17, %22 : vector<16x128xf32>
    %c0_23 = arith.constant 0 : index
    %c0_24 = arith.constant 0 : index
    %c0_25 = arith.constant 0 : index
    %24 = vector.load %arg3[%c0_23, %c0_24, %c0_25] : memref<2x1x128xf32, #tpu.memory_space<vmem>>, vector<1x1x128xf32>
    %25 = vector.shape_cast %24 : vector<1x1x128xf32> to vector<1x128xf32>
    %26 = vector.broadcast %25 : vector<1x128xf32> to vector<16x128xf32>
    %27 = arith.addf %23, %26 : vector<16x128xf32>
    %28 = arith.addf %27, %7 : vector<16x128xf32>
    %c8_26 = arith.constant 8 : index
    %c0_27 = arith.constant 0 : index
    %29 = vector.load %arg5[%c8_26, %c0_27] : memref<32x128xf32, #tpu.memory_space<vmem>>, vector<16x128xf32>
    tpu.vector_store %arg5[%c8_26, %c0_27], %28 {strides = array<i32>} : memref<32x128xf32, #tpu.memory_space<vmem>>, vector<16x128xf32>,
    %c8_28 = arith.constant 8 : index
    %c0_29 = arith.constant 0 : index
    %30 = vector.load %arg5[%c8_28, %c0_29] : memref<32x128xf32, #tpu.memory_space<vmem>>, vector<16x128xf32>
    %c7_30 = arith.constant 7 : index
    %c0_31 = arith.constant 0 : index
    %31 = vector.load %arg5[%c7_30, %c0_31] : memref<32x128xf32, #tpu.memory_space<vmem>>, vector<16x128xf32>
    %32 = arith.truncf %31 : vector<16x128xf32> to vector<16x128xbf16>
    %c1_32 = arith.constant 1 : index
    %c0_33 = arith.constant 0 : index
    %c0_34 = arith.constant 0 : index
    %c0_35 = arith.constant 0 : index
    %33 = vector.load %arg2[%c1_32, %c0_33, %c0_34, %c0_35] : memref<2x3x128x128xbf16, #tpu.memory_space<vmem>>, vector<1x1x128x128xbf16>
    %34 = vector.shape_cast %33 : vector<1x1x128x128xbf16> to vector<128x128xbf16>
    %cst_36 = arith.constant dense<0.000000e+00> : vector<16x128xf32>
    %35 = tpu.matmul %32, %34, %cst_36 {dimension_numbers = #tpu.dot_dimension_numbers<[1], [0], [0], [1], [0, 0, 1, 1], [], []>} : vector<16x128xbf16>, vector<128x128xbf16>, vector<16x128xf32> -> vector<16x128xf32>
    %36 = arith.truncf %30 : vector<16x128xf32> to vector<16x128xbf16>
    %c1_37 = arith.constant 1 : index
    %c1_38 = arith.constant 1 : index
    %c0_39 = arith.constant 0 : index
    %c0_40 = arith.constant 0 : index
    %37 = vector.load %arg2[%c1_37, %c1_38, %c0_39, %c0_40] : memref<2x3x128x128xbf16, #tpu.memory_space<vmem>>, vector<1x1x128x128xbf16>
    %38 = vector.shape_cast %37 : vector<1x1x128x128xbf16> to vector<128x128xbf16>
    %cst_41 = arith.constant dense<0.000000e+00> : vector<16x128xf32>
    %39 = tpu.matmul %36, %38, %cst_41 {dimension_numbers = #tpu.dot_dimension_numbers<[1], [0], [0], [1], [0, 0, 1, 1], [], []>} : vector<16x128xbf16>, vector<128x128xbf16>, vector<16x128xf32> -> vector<16x128xf32>
    %40 = arith.addf %35, %39 : vector<16x128xf32>
    %c9_42 = arith.constant 9 : index
    %c0_43 = arith.constant 0 : index
    %41 = vector.load %arg5[%c9_42, %c0_43] : memref<32x128xf32, #tpu.memory_space<vmem>>, vector<16x128xf32>
    %42 = arith.truncf %41 : vector<16x128xf32> to vector<16x128xbf16>
    %c1_44 = arith.constant 1 : index
    %c2_45 = arith.constant 2 : index
    %c0_46 = arith.constant 0 : index
    %c0_47 = arith.constant 0 : index
    %43 = vector.load %arg2[%c1_44, %c2_45, %c0_46, %c0_47] : memref<2x3x128x128xbf16, #tpu.memory_space<vmem>>, vector<1x1x128x128xbf16>
    %44 = vector.shape_cast %43 : vector<1x1x128x128xbf16> to vector<128x128xbf16>
    %cst_48 = arith.constant dense<0.000000e+00> : vector<16x128xf32>
    %45 = tpu.matmul %42, %44, %cst_48 {dimension_numbers = #tpu.dot_dimension_numbers<[1], [0], [0], [1], [0, 0, 1, 1], [], []>} : vector<16x128xbf16>, vector<128x128xbf16>, vector<16x128xf32> -> vector<16x128xf32>
    %46 = arith.addf %40, %45 : vector<16x128xf32>
    %c1_49 = arith.constant 1 : index
    %c0_50 = arith.constant 0 : index
    %c0_51 = arith.constant 0 : index
    %47 = vector.load %arg3[%c1_49, %c0_50, %c0_51] : memref<2x1x128xf32, #tpu.memory_space<vmem>>, vector<1x1x128xf32>
    %48 = vector.shape_cast %47 : vector<1x1x128xf32> to vector<1x128xf32>
    %49 = vector.broadcast %48 : vector<1x128xf32> to vector<16x128xf32>
    %50 = arith.addf %46, %49 : vector<16x128xf32>
    %51 = arith.addf %50, %30 : vector<16x128xf32>
    %52 = arith.truncf %51 : vector<16x128xf32> to vector<16x128xbf16>
    %c0_52 = arith.constant 0 : index
    %c0_53 = arith.constant 0 : index
    %c0_54 = arith.constant 0 : index
    %53 = vector.load %arg4[%c0_52, %c0_53, %c0_54] : memref<1x16x128xbf16, #tpu.memory_space<vmem>>, vector<1x16x128xbf16>
    %54 = vector.shape_cast %53 : vector<1x16x128xbf16> to vector<16x128xbf16>
    %55 = vector.shape_cast %52 : vector<16x128xbf16> to vector<1x16x128xbf16>
    tpu.vector_store %arg4[%c0_52, %c0_53, %c0_54], %55 {strides = array<i32>} : memref<1x16x128xbf16, #tpu.memory_space<vmem>>, vector<1x16x128xbf16>,
    return
  }
  func.func @transform_0(%arg0: i32) -> (i32, i32, i32) {
    %c0_i32 = arith.constant 0 : i32
    %c0_i32_0 = arith.constant 0 : i32
    %c0_i32_1 = arith.constant 0 : i32
    return %arg0, %c0_i32, %c0_i32_0 : i32, i32, i32
  }
  func.func @transform_1(%arg0: i32) -> (i32, i32, i32, i32) {
    %c0_i32 = arith.constant 0 : i32
    %c0_i32_0 = arith.constant 0 : i32
    %c0_i32_1 = arith.constant 0 : i32
    %c0_i32_2 = arith.constant 0 : i32
    %c0_i32_3 = arith.constant 0 : i32
    return %c0_i32, %c0_i32_0, %c0_i32_1, %c0_i32_2 : i32, i32, i32, i32
  }
  func.func @transform_2(%arg0: i32) -> (i32, i32, i32) {
    %c0_i32 = arith.constant 0 : i32
    %c0_i32_0 = arith.constant 0 : i32
    %c0_i32_1 = arith.constant 0 : i32
    %c0_i32_2 = arith.constant 0 : i32
    return %c0_i32, %c0_i32_0, %c0_i32_1 : i32, i32, i32
  }
  func.func @transform_3(%arg0: i32) -> (i32, i32, i32) {
    %c0_i32 = arith.constant 0 : i32
    %c0_i32_0 = arith.constant 0 : i32
    %c0_i32_1 = arith.constant 0 : i32
    return %arg0, %c0_i32, %c0_i32_0 : i32, i32, i32
  }
}

</mosaic_0001>

<llo_original>
// kernel: tpu_custom_call.1
$region0: #{tpu_custom_call.1}
  #allocation0 [shape = 'u32[]', space=smem, size = 0x4, offset = 0x4, fixed_abs, tag = 'smem constant byte address 0x4 - core index']
  #allocation1 [shape = 'u32[144,128]{1,0:T(1,128)}', space=vmem, size = 0x12000, scoped, tag = 'internal scratch']
  #allocation2 [shape = 'f32[32,128]{1,0:T(8,128)}', space=vmem, size = 0x4000, scoped, tag = 'scratch operand']
  %s0 = inlined_call_operand.hbm [shape: bf16[2,16,128], index: 0, kind: input, shape index: {}]
  %s1 = inlined_call_operand.hbm [shape: bf16[2,3,128,128], index: 1, kind: input, shape index: {}]
  %s2 = inlined_call_operand.hbm [shape: f32[2,1,128], index: 2, kind: input, shape index: {}]
  %s3 = inlined_call_operand.hbm [shape: bf16[2,16,128], index: 3, kind: output, shape index: {}]
  %s4 = sld [smem:[#allocation0]]
  $region57: #{tpu_custom_call.1} parent=0
    _
  %s6 = ssub.s32 1, %s4
  %s7 = scalar_select 0, %s6, %s4
  $region1: #{tpu_custom_call.1} parent=0
    #allocation3 [shape = 'u8[8192]{0}', space=vmem, size = 0x2000, scoped, tag = 'input window, operand 0']
    #allocation4 [shape = 's32[2]{0}', space=sflag, size = 0x8, scoped, tag = 'scoped memory for tpu_custom_call.1']
    #allocation5 [shape = 's32[2]{0}', space=sflag, size = 0x8, scoped, tag = 'scoped memory for tpu_custom_call.1']
    #allocation6 [shape = 'u8[196608]{0}', space=vmem, size = 0x30000, scoped, tag = 'input window, operand 1, single buffered']
    #allocation7 [shape = 's32[1]{0}', space=sflag, size = 0x4, scoped, tag = 'scoped memory for tpu_custom_call.1']
    #allocation8 [shape = 'u8[1024]{0}', space=vmem, size = 0x400, scoped, tag = 'input window, operand 2, single buffered']
    #allocation9 [shape = 'u8[8192]{0}', space=vmem, size = 0x2000, scoped, tag = 'output window, operand 0']
    %8 = vsyncpa [#allocation4], 0
    %s9 = scalar_lea.sflag [#allocation4], 1
    %10 = vsyncpa %s9, 0
    %11 = vsyncpa [#allocation7], 0
    %12 = vsyncpa [#allocation5], 0
    %s13 = scalar_lea.sflag [#allocation5], 1
    %14 = vsyncpa %s13, 0
    loop: start=0, step=1, limit=4
    $region2: #{tpu_custom_call.1} parent=1 // loop_pre_header
      _
    $region3: #{tpu_custom_call.1} parent=1 // loop_header
      %s16 = sphi 0, %s20
      %p17 = scmp.ge.s32.totalorder %s16, 4
      %s26 = sphi 0, %s28
      %s29 = sphi 0, %s26
      %s30 = sphi 0, %s29
      %s46 = sphi 0, %s30
      %s50 = sphi 0, %s50
      %s52 = sphi 0, %s50
      %s53 = sphi 0, %s52
      %s67 = sphi 0, %s53
      %s71 = sphi 0, %s71
      %s73 = sphi 0, %s71
      %s74 = sphi 0, %s73
      %s88 = sphi 0, %s74
      %s94 = sphi 0, %s96
      %s97 = sphi 0, %s94
      %s98 = sphi 0, %s97
      %s114 = sphi 0, %s98
    $region4: #{tpu_custom_call.1} parent=1 // loop_header_branch
      %19 = sbr.rel (%p17) target = $region8
    $region5: #{tpu_custom_call.1} parent=1 // loop_body
      %s21 = ssub.s32 %s16, 1
      %s22 = ssub.s32 %s16, 2
      %s23 = sadd.s32 %s16, 1
      %s24 = ssub.s32 %s16, %s23
      %p25 = scmp.eq.s32.totalorder %s24, 0
      %s27 = sadd.s32 %s26, 1
      %s28 = scalar_select %p25, %s26, %s27
      %p31 = pneg %p25
      %p32 = scmp.eq.s32.totalorder %s16, 1
      %p33 = por %p31, %p32
      %p34 = scmp.ne.s32.totalorder %s26, %s29
      %p35 = scmp.eq.s32.totalorder %s16, 0
      %p36 = por %p34, %p35
      %p37 = scmp.ne.s32.totalorder %s26, %s29
      %p38 = scmp.eq.s32.totalorder %s21, 1
      %p39 = por %p37, %p38
      %p40 = scmp.ne.s32.totalorder %s29, %s30
      %p41 = scmp.eq.s32.totalorder %s21, 0
      %p42 = por %p40, %p41
      %p43 = scmp.ne.s32.totalorder %s29, %s30
      %p44 = scmp.eq.s32.totalorder %s22, 1
      %p45 = por %p43, %p44
      %p47 = scmp.ne.s32.totalorder %s30, %s46
      %p48 = scmp.eq.s32.totalorder %s22, 0
      %p49 = por %p47, %p48
      %s51 = sadd.s32 %s50, 1
      %p54 = scmp.eq.s32.totalorder %s16, 1
      %p55 = scmp.ne.s32.totalorder %s50, %s52
      %p56 = scmp.eq.s32.totalorder %s16, 0
      %p57 = por %p55, %p56
      %p58 = scmp.ne.s32.totalorder %s50, %s52
      %p59 = scmp.eq.s32.totalorder %s21, 1
      %p60 = por %p58, %p59
      %p61 = scmp.ne.s32.totalorder %s52, %s53
      %p62 = scmp.eq.s32.totalorder %s21, 0
      %p63 = por %p61, %p62
      %p64 = scmp.ne.s32.totalorder %s52, %s53
      %p65 = scmp.eq.s32.totalorder %s22, 1
      %p66 = por %p64, %p65
      %p68 = scmp.ne.s32.totalorder %s53, %s67
      %p69 = scmp.eq.s32.totalorder %s22, 0
      %p70 = por %p68, %p69
      %s72 = sadd.s32 %s71, 1
      %p75 = scmp.eq.s32.totalorder %s16, 1
      %p76 = scmp.ne.s32.totalorder %s71, %s73
      %p77 = scmp.eq.s32.totalorder %s16, 0
      %p78 = por %p76, %p77
      %p79 = scmp.ne.s32.totalorder %s71, %s73
      %p80 = scmp.eq.s32.totalorder %s21, 1
      %p81 = por %p79, %p80
      %p82 = scmp.ne.s32.totalorder %s73, %s74
      %p83 = scmp.eq.s32.totalorder %s21, 0
      %p84 = por %p82, %p83
      %p85 = scmp.ne.s32.totalorder %s73, %s74
      %p86 = scmp.eq.s32.totalorder %s22, 1
      %p87 = por %p85, %p86
      %p89 = scmp.ne.s32.totalorder %s74, %s88
      %p90 = scmp.eq.s32.totalorder %s22, 0
      %p91 = por %p89, %p90
      %s92 = ssub.s32 %s16, %s23
      %p93 = scmp.eq.s32.totalorder %s92, 0
      %s95 = sadd.s32 %s94, 1
      %s96 = scalar_select %p93, %s94, %s95
      %p99 = pneg %p93
      %p100 = scmp.eq.s32.totalorder %s16, 1
      %p101 = por %p99, %p100
      %p102 = scmp.ne.s32.totalorder %s94, %s97
      %p103 = scmp.eq.s32.totalorder %s16, 0
      %p104 = por %p102, %p103
      %p105 = scmp.ne.s32.totalorder %s94, %s97
      %p106 = scmp.eq.s32.totalorder %s21, 1
      %p107 = por %p105, %p106
      %p108 = scmp.ne.s32.totalorder %s97, %s98
      %p109 = scmp.eq.s32.totalorder %s21, 0
      %p110 = por %p108, %p109
      %p111 = scmp.ne.s32.totalorder %s97, %s98
      %p112 = scmp.eq.s32.totalorder %s22, 1
      %p113 = por %p111, %p112
      %p115 = scmp.ne.s32.totalorder %s98, %s114
      %p116 = scmp.eq.s32.totalorder %s22, 0
      %p117 = por %p115, %p116
      %p118 = scmp.le.s32.totalorder 1, %s16
      %p119 = scmp.lt.s32.totalorder %s16, 3
      %p120 = pnand %p118, %p119
      %p121 = pneg %p120
      // Predicated region
      $region9: #{tpu_custom_call.1} parent=5 // pred_check
        _
      $region10: #{tpu_custom_call.1} parent=5 // pred_check_branch
        %123 = sbr.rel (%p120) target = $region12
      $region11: #{tpu_custom_call.1} parent=5 // pred_region
        %s124 = ssub.s32 %s16, 1
        // Predicated region
        $region13: #{tpu_custom_call.1} parent=11 // pred_check
          %p125 = pneg %p63
        $region14: #{tpu_custom_call.1} parent=11 // pred_check_branch
          %127 = sbr.rel (%p125) target = $region16
        $region15: #{tpu_custom_call.1} parent=11 // pred_region
          %s129 = ssub.s32 6144, 6144
          %130 = vsyncadd [#allocation7], %s129
          %s131 = sshll.u32 [#allocation6], 4
          %s132 = int_to_ptr.vmem [resolvable:$true] %s131
          %137 = dma.hbm_to_vmem [thread:$0]  %s1, 6144, %s132, [#allocation7], 64, 64, 4
        $region16: #{tpu_custom_call.1} parent=11 // pred_fallthru
          _
        // Predicated region
        $region17: #{tpu_custom_call.1} parent=11 // pred_check
          %p138 = pneg %p84
        $region18: #{tpu_custom_call.1} parent=11 // pred_check_branch
          %140 = sbr.rel (%p138) target = $region20
        $region19: #{tpu_custom_call.1} parent=11 // pred_region
          %s142 = ssub.s32 32, 32
          %143 = vsyncadd [#allocation7], %s142
          %s144 = sshll.u32 [#allocation8], 4
          %s145 = int_to_ptr.vmem [resolvable:$true] %s144
          %150 = dma.hbm_to_vmem [thread:$0]  %s2, 32, %s145, [#allocation7], 16, 16, 1
        $region20: #{tpu_custom_call.1} parent=11 // pred_fallthru
          _
      $region12: #{tpu_custom_call.1} parent=5 // pred_fallthru
        _
      %p151 = scmp.lt.s32.totalorder %s16, 2
      // Predicated region
      $region21: #{tpu_custom_call.1} parent=5 // pred_check
        %p152 = pneg %p151
      $region22: #{tpu_custom_call.1} parent=5 // pred_check_branch
        %154 = sbr.rel (%p152) target = $region24
      $region23: #{tpu_custom_call.1} parent=5 // pred_region
        // Predicated region
        $region25: #{tpu_custom_call.1} parent=23 // pred_check
          %p155 = pneg %p36
        $region26: #{tpu_custom_call.1} parent=23 // pred_check_branch
          %157 = sbr.rel (%p155) target = $region28
        $region27: #{tpu_custom_call.1} parent=23 // pred_region
          %s158 = sand.u32 %s26, 1
          %s159 = scalar_lea.sflag [#allocation4], %s158
          %s160 = sand.u32 %s26, 1
          %s161 = smul.addr %s160, 8
          %s162 = scalar_lea.vmem [#allocation3], %s161
          %s164 = ssub.s32 128, 128
          %165 = vsyncadd %s159, %s164
          %s166 = smul.addr %s16, 2
          %s167 = smul.addr %s166, 64
          %s168 = scalar_lea.hbm %s0, %s167
          %s169 = sshll.u32 %s162, 4
          %s170 = int_to_ptr.vmem [resolvable:$true] %s169
          %175 = dma.hbm_to_vmem [thread:$0]  %s168, 128, %s170, %s159, 64, 64, 4
        $region28: #{tpu_custom_call.1} parent=23 // pred_fallthru
          _
      $region24: #{tpu_custom_call.1} parent=5 // pred_fallthru
        _
      %p176 = scmp.le.s32.totalorder 1, %s16
      %p177 = scmp.lt.s32.totalorder %s16, 3
      %p178 = pnand %p176, %p177
      %p179 = pneg %p178
      // Predicated region
      $region29: #{tpu_custom_call.1} parent=5 // pred_check
        _
      $region30: #{tpu_custom_call.1} parent=5 // pred_check_branch
        %181 = sbr.rel (%p178) target = $region32
      $region31: #{tpu_custom_call.1} parent=5 // pred_region
        %s182 = ssub.s32 %s16, 1
        %s183 = sand.u32 %s29, 1
        %s184 = scalar_lea.sflag [#allocation4], %s183
        %s185 = sand.u32 %s29, 1
        %s186 = smul.addr %s185, 8
        %s187 = scalar_lea.vmem [#allocation3], %s186
        // Predicated region
        $region33: #{tpu_custom_call.1} parent=31 // pred_check
          %p188 = pneg %p42
        $region34: #{tpu_custom_call.1} parent=31 // pred_check_branch
          %190 = sbr.rel (%p188) target = $region36
        $region35: #{tpu_custom_call.1} parent=31 // pred_region
          %191 = dma.done %s184, 128
        $region36: #{tpu_custom_call.1} parent=31 // pred_fallthru
          _
        // Predicated region
        $region37: #{tpu_custom_call.1} parent=31 // pred_check
          %p192 = pneg %p63
        $region38: #{tpu_custom_call.1} parent=31 // pred_check_branch
          %194 = sbr.rel (%p192) target = $region40
        $region39: #{tpu_custom_call.1} parent=31 // pred_region
          %195 = dma.done [#allocation7], 6144
        $region40: #{tpu_custom_call.1} parent=31 // pred_fallthru
          _
        // Predicated region
        $region41: #{tpu_custom_call.1} parent=31 // pred_check
          %p196 = pneg %p84
        $region42: #{tpu_custom_call.1} parent=31 // pred_check_branch
          %198 = sbr.rel (%p196) target = $region44
        $region43: #{tpu_custom_call.1} parent=31 // pred_region
          %199 = dma.done [#allocation7], 32
        $region44: #{tpu_custom_call.1} parent=31 // pred_fallthru
          _
        %s200 = sand.u32 %s29, 1
        %s201 = scalar_lea.sflag [#allocation4], %s200
        %s202 = sand.u32 %s29, 1
        %s203 = smul.addr %s202, 8
        %s204 = scalar_lea.vmem [#allocation3], %s203
        %p205 = pneg %p42
        %p206 = pneg %p39
        %p207 = pneg %p63
        %p208 = pneg %p60
        %p209 = pneg %p84
        %p210 = pneg %p81
        %p211 = pneg %p110
        %p212 = pneg %p107
        %s213 = sand.u32 %s97, 1
        %s214 = scalar_lea.sflag [#allocation5], %s213
        %s215 = sand.u32 %s97, 1
        %s216 = smul.addr %s215, 8
        %s217 = scalar_lea.vmem [#allocation9], %s216
        %219 = vst [vmem:[#allocation2 + $0x7] sm:$0x1] 0.0
        %220 = vst [vmem:[#allocation2 + $0x18] sm:$0x1] 0.0
        %v221 = vld [vmem:[%s187] sm:$0xf]
        %v222 = vld [vmem:[%s187 + $0x4] sm:$0xf]
        %v223 = vunpack.c.l.bf16 %v221
        %v224 = vunpack.c.l.bf16 %v222
        %225 = vst [vmem:[#allocation2 + $0x8] sm:$0xff] %v223
        %226 = vst [vmem:[#allocation2 + $0x10] sm:$0xff] %v224
        %v227 = vld [vmem:[#allocation2 + $0x8] sm:$0xff]
        %v228 = vld [vmem:[#allocation2 + $0x10] sm:$0xff]
        %v229 = vld [vmem:[#allocation2 + $0x7] sm:$0xff]
        %v230 = vld [vmem:[#allocation2 + $0xf] sm:$0xff]
        %v231 = vpack.c.bf16 %v230, %v229
        %v232 = vld [vmem:[#allocation6] sm:$0xf]
        %v233 = vld [vmem:[#allocation6 + $0x4] sm:$0xf]
        %v234 = vld [vmem:[#allocation6 + $0x8] sm:$0xf]
        %v235 = vld [vmem:[#allocation6 + $0xc] sm:$0xf]
        %v236 = vld [vmem:[#allocation6 + $0x10] sm:$0xf]
        %v237 = vld [vmem:[#allocation6 + $0x14] sm:$0xf]
        %v238 = vld [vmem:[#allocation6 + $0x18] sm:$0xf]
        %v239 = vld [vmem:[#allocation6 + $0x1c] sm:$0xf]
        %v240 = vld [vmem:[#allocation6 + $0x20] sm:$0xf]
        %v241 = vld [vmem:[#allocation6 + $0x24] sm:$0xf]
        %v242 = vld [vmem:[#allocation6 + $0x28] sm:$0xf]
        %v243 = vld [vmem:[#allocation6 + $0x2c] sm:$0xf]
        %v244 = vld [vmem:[#allocation6 + $0x30] sm:$0xf]
        %v245 = vld [vmem:[#allocation6 + $0x34] sm:$0xf]
        %v246 = vld [vmem:[#allocation6 + $0x38] sm:$0xf]
        %v247 = vld [vmem:[#allocation6 + $0x3c] sm:$0xf]
        %v248 = vpack.c.bf16 %v228, %v227
        %s249 = scalar_lea.vmem [#allocation6], 64
        %v250 = vld [vmem:[%s249] sm:$0xf]
        %v251 = vld [vmem:[%s249 + $0x4] sm:$0xf]
        %v252 = vld [vmem:[%s249 + $0x8] sm:$0xf]
        %v253 = vld [vmem:[%s249 + $0xc] sm:$0xf]
        %v254 = vld [vmem:[%s249 + $0x10] sm:$0xf]
        %v255 = vld [vmem:[%s249 + $0x14] sm:$0xf]
        %v256 = vld [vmem:[%s249 + $0x18] sm:$0xf]
        %v257 = vld [vmem:[%s249 + $0x1c] sm:$0xf]
        %v258 = vld [vmem:[%s249 + $0x20] sm:$0xf]
        %v259 = vld [vmem:[%s249 + $0x24] sm:$0xf]
        %v260 = vld [vmem:[%s249 + $0x28] sm:$0xf]
        %v261 = vld [vmem:[%s249 + $0x2c] sm:$0xf]
        %v262 = vld [vmem:[%s249 + $0x30] sm:$0xf]
        %v263 = vld [vmem:[%s249 + $0x34] sm:$0xf]
        %v264 = vld [vmem:[%s249 + $0x38] sm:$0xf]
        %v265 = vld [vmem:[%s249 + $0x3c] sm:$0xf]
        %v282 = vunpack.c.l.b16 %v250
        %v283 = vunpack.c.l.b16 %v251
        %v284 = vunpack.c.l.b16 %v252
        %v285 = vunpack.c.l.b16 %v253
        %v286 = vunpack.c.l.b16 %v254
        %v287 = vunpack.c.l.b16 %v255
        %v288 = vunpack.c.l.b16 %v256
        %v289 = vunpack.c.l.b16 %v257
        %v290 = vunpack.c.l.b16 %v258
        %v291 = vunpack.c.l.b16 %v259
        %v292 = vunpack.c.l.b16 %v260
        %v293 = vunpack.c.l.b16 %v261
        %v294 = vunpack.c.l.b16 %v262
        %v295 = vunpack.c.l.b16 %v263
        %v296 = vunpack.c.l.b16 %v264
        %v297 = vunpack.c.l.b16 %v265
        %v298 = vpack.c.b16 %v283, %v282
        %v299 = vpack.c.b16 %v285, %v284
        %v300 = vpack.c.b16 %v287, %v286
        %v301 = vpack.c.b16 %v289, %v288
        %v302 = vpack.c.b16 %v291, %v290
        %v303 = vpack.c.b16 %v293, %v292
        %v304 = vpack.c.b16 %v295, %v294
        %v305 = vpack.c.b16 %v297, %v296
        %314 = vmatprep.subr.bf16.mxu0 0
        %315 = vmatpush1.bf16.msra.mxu0 %v298
        %316 = vmatprep.subr.bf16.mxu0 0
        %317 = vmatpush1.bf16.msra.mxu0 %v299
        %318 = vmatprep.subr.bf16.mxu0 0
        %319 = vmatpush1.bf16.msra.mxu0 %v300
        %320 = vmatprep.subr.bf16.mxu0 0
        %321 = vmatpush1.bf16.msra.mxu0 %v301
        %322 = vmatprep.subr.bf16.mxu0 0
        %323 = vmatpush1.bf16.msra.mxu0 %v302
        %324 = vmatprep.subr.bf16.mxu0 0
        %325 = vmatpush1.bf16.msra.mxu0 %v303
        %326 = vmatprep.subr.bf16.mxu0 0
        %327 = vmatpush1.bf16.msra.mxu0 %v304
        %328 = vmatprep.subr.bf16.mxu0 0
        %329 = vmatpush1.bf16.msra.mxu0 %v305
        %330 = vmatprep.subr.bf16.mxu0 0
        %331 = vmatpush1.bf16.msra.mxu0 0
        %332 = vmatprep.subr.bf16.mxu0 0
        %333 = vmatpush1.bf16.msra.mxu0 0
        %334 = vmatprep.subr.bf16.mxu0 0
        %335 = vmatpush1.bf16.msra.mxu0 0
        %336 = vmatprep.subr.bf16.mxu0 0
        %337 = vmatpush1.bf16.msra.mxu0 0
        %338 = vmatprep.subr.bf16.mxu0 0
        %339 = vmatpush1.bf16.msra.mxu0 0
        %340 = vmatprep.subr.bf16.mxu0 0
        %341 = vmatpush1.bf16.msra.mxu0 0
        %342 = vmatprep.subr.bf16.mxu0 0
        %343 = vmatpush1.bf16.msra.mxu0 0
        %344 = vmatprep.subr.bf16.mxu0 0
        %345 = vmatpush1.bf16.msra.mxu0 0
        %346 = vmatprep.mubr.bf16.mxu0 0
        %347 = vmatmul.mubr.bf16.gmra.mrb[0].mxu0 %v248
        %v348 = vpop.f32.mrb[0].mxu0
        %v349 = vadd.f32 0.0, %v348
        %v350 = vpop.f32.mrb[0].mxu0
        %v351 = vpop.f32.mrb[0].mxu0
        %v352 = vadd.f32 0.0, %v351
        %v353 = vpop.f32.mrb[0].mxu0
        %354 = vdwg.mxu0
        %v371 = vunpack.c.l.b16 %v232
        %v372 = vunpack.c.l.b16 %v233
        %v373 = vunpack.c.l.b16 %v234
        %v374 = vunpack.c.l.b16 %v235
        %v375 = vunpack.c.l.b16 %v236
        %v376 = vunpack.c.l.b16 %v237
        %v377 = vunpack.c.l.b16 %v238
        %v378 = vunpack.c.l.b16 %v239
        %v379 = vunpack.c.l.b16 %v240
        %v380 = vunpack.c.l.b16 %v241
        %v381 = vunpack.c.l.b16 %v242
        %v382 = vunpack.c.l.b16 %v243
        %v383 = vunpack.c.l.b16 %v244
        %v384 = vunpack.c.l.b16 %v245
        %v385 = vunpack.c.l.b16 %v246
        %v386 = vunpack.c.l.b16 %v247
        %v387 = vpack.c.b16 %v372, %v371
        %v388 = vpack.c.b16 %v374, %v373
        %v389 = vpack.c.b16 %v376, %v375
        %v390 = vpack.c.b16 %v378, %v377
        %v391 = vpack.c.b16 %v380, %v379
        %v392 = vpack.c.b16 %v382, %v381
        %v393 = vpack.c.b16 %v384, %v383
        %v394 = vpack.c.b16 %v386, %v385
        %403 = vmatprep.subr.bf16.mxu0 0
        %404 = vmatpush1.bf16.msra.mxu0 %v387
        %405 = vmatprep.subr.bf16.mxu0 0
        %406 = vmatpush1.bf16.msra.mxu0 %v388
        %407 = vmatprep.subr.bf16.mxu0 0
        %408 = vmatpush1.bf16.msra.mxu0 %v389
        %409 = vmatprep.subr.bf16.mxu0 0
        %410 = vmatpush1.bf16.msra.mxu0 %v390
        %411 = vmatprep.subr.bf16.mxu0 0
        %412 = vmatpush1.bf16.msra.mxu0 %v391
        %413 = vmatprep.subr.bf16.mxu0 0
        %414 = vmatpush1.bf16.msra.mxu0 %v392
        %415 = vmatprep.subr.bf16.mxu0 0
        %416 = vmatpush1.bf16.msra.mxu0 %v393
        %417 = vmatprep.subr.bf16.mxu0 0
        %418 = vmatpush1.bf16.msra.mxu0 %v394
        %419 = vmatprep.subr.bf16.mxu0 0
        %420 = vmatpush1.bf16.msra.mxu0 0
        %421 = vmatprep.subr.bf16.mxu0 0
        %422 = vmatpush1.bf16.msra.mxu0 0
        %423 = vmatprep.subr.bf16.mxu0 0
        %424 = vmatpush1.bf16.msra.mxu0 0
        %425 = vmatprep.subr.bf16.mxu0 0
        %426 = vmatpush1.bf16.msra.mxu0 0
        %427 = vmatprep.subr.bf16.mxu0 0
        %428 = vmatpush1.bf16.msra.mxu0 0
        %429 = vmatprep.subr.bf16.mxu0 0
        %430 = vmatpush1.bf16.msra.mxu0 0
        %431 = vmatprep.subr.bf16.mxu0 0
        %432 = vmatpush1.bf16.msra.mxu0 0
        %433 = vmatprep.subr.bf16.mxu0 0
        %434 = vmatpush1.bf16.msra.mxu0 0
        %435 = vmatprep.mubr.bf16.mxu0 0
        %436 = vmatmul.mubr.bf16.gmra.mrb[0].mxu0 %v231
        %v437 = vpop.f32.mrb[0].mxu0
        %v438 = vadd.f32 %v349, %v437
        %v439 = vpop.f32.mrb[0].mxu0
        %v440 = vpop.f32.mrb[0].mxu0
        %v441 = vadd.f32 %v352, %v440
        %v442 = vpop.f32.mrb[0].mxu0
        %443 = vdwg.mxu0
        %v444 = vld [vmem:[#allocation2 + $0x9] sm:$0xff]
        %v445 = vld [vmem:[#allocation2 + $0x11] sm:$0xff]
        %v446 = vpack.c.bf16 %v445, %v444
        %s447 = scalar_lea.vmem [#allocation6], 128
        %v448 = vld [vmem:[%s447] sm:$0xf]
        %v449 = vld [vmem:[%s447 + $0x4] sm:$0xf]
        %v450 = vld [vmem:[%s447 + $0x8] sm:$0xf]
        %v451 = vld [vmem:[%s447 + $0xc] sm:$0xf]
        %v452 = vld [vmem:[%s447 + $0x10] sm:$0xf]
        %v453 = vld [vmem:[%s447 + $0x14] sm:$0xf]
        %v454 = vld [vmem:[%s447 + $0x18] sm:$0xf]
        %v455 = vld [vmem:[%s447 + $0x1c] sm:$0xf]
        %v456 = vld [vmem:[%s447 + $0x20] sm:$0xf]
        %v457 = vld [vmem:[%s447 + $0x24] sm:$0xf]
        %v458 = vld [vmem:[%s447 + $0x28] sm:$0xf]
        %v459 = vld [vmem:[%s447 + $0x2c] sm:$0xf]
        %v460 = vld [vmem:[%s447 + $0x30] sm:$0xf]
        %v461 = vld [vmem:[%s447 + $0x34] sm:$0xf]
        %v462 = vld [vmem:[%s447 + $0x38] sm:$0xf]
        %v463 = vld [vmem:[%s447 + $0x3c] sm:$0xf]
        %v480 = vunpack.c.l.b16 %v448
        %v481 = vunpack.c.l.b16 %v449
        %v482 = vunpack.c.l.b16 %v450
        %v483 = vunpack.c.l.b16 %v451
        %v484 = vunpack.c.l.b16 %v452
        %v485 = vunpack.c.l.b16 %v453
        %v486 = vunpack.c.l.b16 %v454
        %v487 = vunpack.c.l.b16 %v455
        %v488 = vunpack.c.l.b16 %v456
        %v489 = vunpack.c.l.b16 %v457
        %v490 = vunpack.c.l.b16 %v458
        %v491 = vunpack.c.l.b16 %v459
        %v492 = vunpack.c.l.b16 %v460
        %v493 = vunpack.c.l.b16 %v461
        %v494 = vunpack.c.l.b16 %v462
        %v495 = vunpack.c.l.b16 %v463
        %v496 = vpack.c.b16 %v481, %v480
        %v497 = vpack.c.b16 %v483, %v482
        %v498 = vpack.c.b16 %v485, %v484
        %v499 = vpack.c.b16 %v487, %v486
        %v500 = vpack.c.b16 %v489, %v488
        %v501 = vpack.c.b16 %v491, %v490
        %v502 = vpack.c.b16 %v493, %v492
        %v503 = vpack.c.b16 %v495, %v494
        %512 = vmatprep.subr.bf16.mxu0 0
        %513 = vmatpush1.bf16.msra.mxu0 %v496
        %514 = vmatprep.subr.bf16.mxu0 0
        %515 = vmatpush1.bf16.msra.mxu0 %v497
        %516 = vmatprep.subr.bf16.mxu0 0
        %517 = vmatpush1.bf16.msra.mxu0 %v498
        %518 = vmatprep.subr.bf16.mxu0 0
        %519 = vmatpush1.bf16.msra.mxu0 %v499
        %520 = vmatprep.subr.bf16.mxu0 0
        %521 = vmatpush1.bf16.msra.mxu0 %v500
        %522 = vmatprep.subr.bf16.mxu0 0
        %523 = vmatpush1.bf16.msra.mxu0 %v501
        %524 = vmatprep.subr.bf16.mxu0 0
        %525 = vmatpush1.bf16.msra.mxu0 %v502
        %526 = vmatprep.subr.bf16.mxu0 0
        %527 = vmatpush1.bf16.msra.mxu0 %v503
        %528 = vmatprep.subr.bf16.mxu0 0
        %529 = vmatpush1.bf16.msra.mxu0 0
        %530 = vmatprep.subr.bf16.mxu0 0
        %531 = vmatpush1.bf16.msra.mxu0 0
        %532 = vmatprep.subr.bf16.mxu0 0
        %533 = vmatpush1.bf16.msra.mxu0 0
        %534 = vmatprep.subr.bf16.mxu0 0
        %535 = vmatpush1.bf16.msra.mxu0 0
        %536 = vmatprep.subr.bf16.mxu0 0
        %537 = vmatpush1.bf16.msra.mxu0 0
        %538 = vmatprep.subr.bf16.mxu0 0
        %539 = vmatpush1.bf16.msra.mxu0 0
        %540 = vmatprep.subr.bf16.mxu0 0
        %541 = vmatpush1.bf16.msra.mxu0 0
        %542 = vmatprep.subr.bf16.mxu0 0
        %543 = vmatpush1.bf16.msra.mxu0 0
        %544 = vmatprep.mubr.bf16.mxu0 0
        %545 = vmatmul.mubr.bf16.gmra.mrb[0].mxu0 %v446
        %v546 = vpop.f32.mrb[0].mxu0
        %v547 = vadd.f32 0.0, %v546
        %v548 = vpop.f32.mrb[0].mxu0
        %v549 = vpop.f32.mrb[0].mxu0
        %v550 = vadd.f32 0.0, %v549
        %v551 = vpop.f32.mrb[0].mxu0
        %552 = vdwg.mxu0
        %v553 = vadd.f32 %v438, %v547
        %v554 = vadd.f32 %v441, %v550
        %v555 = vld [vmem:[#allocation8] sm:$0x1]
        %v557 = vlaneseq
        %v558 = vshrl.u32 %v557, 7
        %v559 = vsub.s32 0, %v558
        %v560 = vrot.slane %v555, %v559
        %v562 = vadd.f32 %v553, %v560
        %v563 = vadd.f32 %v554, %v560
        %v564 = vadd.f32 %v562, %v227
        %v565 = vadd.f32 %v563, %v228
        %566 = vst [vmem:[#allocation2 + $0x8] sm:$0xff] %v564
        %567 = vst [vmem:[#allocation2 + $0x10] sm:$0xff] %v565
        %v568 = vld [vmem:[#allocation2 + $0x8] sm:$0xff]
        %v569 = vld [vmem:[#allocation2 + $0x10] sm:$0xff]
        %v570 = vld [vmem:[#allocation2 + $0x7] sm:$0xff]
        %v571 = vld [vmem:[#allocation2 + $0xf] sm:$0xff]
        %v572 = vpack.c.bf16 %v571, %v570
        %s573 = scalar_lea.vmem [#allocation6], 192
        %v574 = vld [vmem:[%s573] sm:$0xf]
        %v575 = vld [vmem:[%s573 + $0x4] sm:$0xf]
        %v576 = vld [vmem:[%s573 + $0x8] sm:$0xf]
        %v577 = vld [vmem:[%s573 + $0xc] sm:$0xf]
        %v578 = vld [vmem:[%s573 + $0x10] sm:$0xf]
        %v579 = vld [vmem:[%s573 + $0x14] sm:$0xf]
        %v580 = vld [vmem:[%s573 + $0x18] sm:$0xf]
        %v581 = vld [vmem:[%s573 + $0x1c] sm:$0xf]
        %v582 = vld [vmem:[%s573 + $0x20] sm:$0xf]
        %v583 = vld [vmem:[%s573 + $0x24] sm:$0xf]
        %v584 = vld [vmem:[%s573 + $0x28] sm:$0xf]
        %v585 = vld [vmem:[%s573 + $0x2c] sm:$0xf]
        %v586 = vld [vmem:[%s573 + $0x30] sm:$0xf]
        %v587 = vld [vmem:[%s573 + $0x34] sm:$0xf]
        %v588 = vld [vmem:[%s573 + $0x38] sm:$0xf]
        %v589 = vld [vmem:[%s573 + $0x3c] sm:$0xf]
        %v590 = vpack.c.bf16 %v569, %v568
        %s591 = scalar_lea.vmem [#allocation6], 256
        %v592 = vld [vmem:[%s591] sm:$0xf]
        %v593 = vld [vmem:[%s591 + $0x4] sm:$0xf]
        %v594 = vld [vmem:[%s591 + $0x8] sm:$0xf]
        %v595 = vld [vmem:[%s591 + $0xc] sm:$0xf]
        %v596 = vld [vmem:[%s591 + $0x10] sm:$0xf]
        %v597 = vld [vmem:[%s591 + $0x14] sm:$0xf]
        %v598 = vld [vmem:[%s591 + $0x18] sm:$0xf]
        %v599 = vld [vmem:[%s591 + $0x1c] sm:$0xf]
        %v600 = vld [vmem:[%s591 + $0x20] sm:$0xf]
        %v601 = vld [vmem:[%s591 + $0x24] sm:$0xf]
        %v602 = vld [vmem:[%s591 + $0x28] sm:$0xf]
        %v603 = vld [vmem:[%s591 + $0x2c] sm:$0xf]
        %v604 = vld [vmem:[%s591 + $0x30] sm:$0xf]
        %v605 = vld [vmem:[%s591 + $0x34] sm:$0xf]
        %v606 = vld [vmem:[%s591 + $0x38] sm:$0xf]
        %v607 = vld [vmem:[%s591 + $0x3c] sm:$0xf]
        %v624 = vunpack.c.l.b16 %v592
        %v625 = vunpack.c.l.b16 %v593
        %v626 = vunpack.c.l.b16 %v594
        %v627 = vunpack.c.l.b16 %v595
        %v628 = vunpack.c.l.b16 %v596
        %v629 = vunpack.c.l.b16 %v597
        %v630 = vunpack.c.l.b16 %v598
        %v631 = vunpack.c.l.b16 %v599
        %v632 = vunpack.c.l.b16 %v600
        %v633 = vunpack.c.l.b16 %v601
        %v634 = vunpack.c.l.b16 %v602
        %v635 = vunpack.c.l.b16 %v603
        %v636 = vunpack.c.l.b16 %v604
        %v637 = vunpack.c.l.b16 %v605
        %v638 = vunpack.c.l.b16 %v606
        %v639 = vunpack.c.l.b16 %v607
        %v640 = vpack.c.b16 %v625, %v624
        %v641 = vpack.c.b16 %v627, %v626
        %v642 = vpack.c.b16 %v629, %v628
        %v643 = vpack.c.b16 %v631, %v630
        %v644 = vpack.c.b16 %v633, %v632
        %v645 = vpack.c.b16 %v635, %v634
        %v646 = vpack.c.b16 %v637, %v636
        %v647 = vpack.c.b16 %v639, %v638
        %656 = vmatprep.subr.bf16.mxu0 0
        %657 = vmatpush1.bf16.msra.mxu0 %v640
        %658 = vmatprep.subr.bf16.mxu0 0
        %659 = vmatpush1.bf16.msra.mxu0 %v641
        %660 = vmatprep.subr.bf16.mxu0 0
        %661 = vmatpush1.bf16.msra.mxu0 %v642
        %662 = vmatprep.subr.bf16.mxu0 0
        %663 = vmatpush1.bf16.msra.mxu0 %v643
        %664 = vmatprep.subr.bf16.mxu0 0
        %665 = vmatpush1.bf16.msra.mxu0 %v644
        %666 = vmatprep.subr.bf16.mxu0 0
        %667 = vmatpush1.bf16.msra.mxu0 %v645
        %668 = vmatprep.subr.bf16.mxu0 0
        %669 = vmatpush1.bf16.msra.mxu0 %v646
        %670 = vmatprep.subr.bf16.mxu0 0
        %671 = vmatpush1.bf16.msra.mxu0 %v647
        %672 = vmatprep.subr.bf16.mxu0 0
        %673 = vmatpush1.bf16.msra.mxu0 0
        %674 = vmatprep.subr.bf16.mxu0 0
        %675 = vmatpush1.bf16.msra.mxu0 0
        %676 = vmatprep.subr.bf16.mxu0 0
        %677 = vmatpush1.bf16.msra.mxu0 0
        %678 = vmatprep.subr.bf16.mxu0 0
        %679 = vmatpush1.bf16.msra.mxu0 0
        %680 = vmatprep.subr.bf16.mxu0 0
        %681 = vmatpush1.bf16.msra.mxu0 0
        %682 = vmatprep.subr.bf16.mxu0 0
        %683 = vmatpush1.bf16.msra.mxu0 0
        %684 = vmatprep.subr.bf16.mxu0 0
        %685 = vmatpush1.bf16.msra.mxu0 0
        %686 = vmatprep.subr.bf16.mxu0 0
        %687 = vmatpush1.bf16.msra.mxu0 0
        %688 = vmatprep.mubr.bf16.mxu0 0
        %689 = vmatmul.mubr.bf16.gmra.mrb[0].mxu0 %v590
        %v690 = vpop.f32.mrb[0].mxu0
        %v691 = vadd.f32 0.0, %v690
        %v692 = vpop.f32.mrb[0].mxu0
        %v693 = vpop.f32.mrb[0].mxu0
        %v694 = vadd.f32 0.0, %v693
        %v695 = vpop.f32.mrb[0].mxu0
        %696 = vdwg.mxu0
        %v713 = vunpack.c.l.b16 %v574
        %v714 = vunpack.c.l.b16 %v575
        %v715 = vunpack.c.l.b16 %v576
        %v716 = vunpack.c.l.b16 %v577
        %v717 = vunpack.c.l.b16 %v578
        %v718 = vunpack.c.l.b16 %v579
        %v719 = vunpack.c.l.b16 %v580
        %v720 = vunpack.c.l.b16 %v581
        %v721 = vunpack.c.l.b16 %v582
        %v722 = vunpack.c.l.b16 %v583
        %v723 = vunpack.c.l.b16 %v584
        %v724 = vunpack.c.l.b16 %v585
        %v725 = vunpack.c.l.b16 %v586
        %v726 = vunpack.c.l.b16 %v587
        %v727 = vunpack.c.l.b16 %v588
        %v728 = vunpack.c.l.b16 %v589
        %v729 = vpack.c.b16 %v714, %v713
        %v730 = vpack.c.b16 %v716, %v715
        %v731 = vpack.c.b16 %v718, %v717
        %v732 = vpack.c.b16 %v720, %v719
        %v733 = vpack.c.b16 %v722, %v721
        %v734 = vpack.c.b16 %v724, %v723
        %v735 = vpack.c.b16 %v726, %v725
        %v736 = vpack.c.b16 %v728, %v727
        %745 = vmatprep.subr.bf16.mxu0 0
        %746 = vmatpush1.bf16.msra.mxu0 %v729
        %747 = vmatprep.subr.bf16.mxu0 0
        %748 = vmatpush1.bf16.msra.mxu0 %v730
        %749 = vmatprep.subr.bf16.mxu0 0
        %750 = vmatpush1.bf16.msra.mxu0 %v731
        %751 = vmatprep.subr.bf16.mxu0 0
        %752 = vmatpush1.bf16.msra.mxu0 %v732
        %753 = vmatprep.subr.bf16.mxu0 0
        %754 = vmatpush1.bf16.msra.mxu0 %v733
        %755 = vmatprep.subr.bf16.mxu0 0
        %756 = vmatpush1.bf16.msra.mxu0 %v734
        %757 = vmatprep.subr.bf16.mxu0 0
        %758 = vmatpush1.bf16.msra.mxu0 %v735
        %759 = vmatprep.subr.bf16.mxu0 0
        %760 = vmatpush1.bf16.msra.mxu0 %v736
        %761 = vmatprep.subr.bf16.mxu0 0
        %762 = vmatpush1.bf16.msra.mxu0 0
        %763 = vmatprep.subr.bf16.mxu0 0
        %764 = vmatpush1.bf16.msra.mxu0 0
        %765 = vmatprep.subr.bf16.mxu0 0
        %766 = vmatpush1.bf16.msra.mxu0 0
        %767 = vmatprep.subr.bf16.mxu0 0
        %768 = vmatpush1.bf16.msra.mxu0 0
        %769 = vmatprep.subr.bf16.mxu0 0
        %770 = vmatpush1.bf16.msra.mxu0 0
        %771 = vmatprep.subr.bf16.mxu0 0
        %772 = vmatpush1.bf16.msra.mxu0 0
        %773 = vmatprep.subr.bf16.mxu0 0
        %774 = vmatpush1.bf16.msra.mxu0 0
        %775 = vmatprep.subr.bf16.mxu0 0
        %776 = vmatpush1.bf16.msra.mxu0 0
        %777 = vmatprep.mubr.bf16.mxu0 0
        %778 = vmatmul.mubr.bf16.gmra.mrb[0].mxu0 %v572
        %v779 = vpop.f32.mrb[0].mxu0
        %v780 = vadd.f32 %v691, %v779
        %v781 = vpop.f32.mrb[0].mxu0
        %v782 = vpop.f32.mrb[0].mxu0
        %v783 = vadd.f32 %v694, %v782
        %v784 = vpop.f32.mrb[0].mxu0
        %785 = vdwg.mxu0
        %v786 = vld [vmem:[#allocation2 + $0x9] sm:$0xff]
        %v787 = vld [vmem:[#allocation2 + $0x11] sm:$0xff]
        %v788 = vpack.c.bf16 %v787, %v786
        %s789 = scalar_lea.vmem [#allocation6], 320
        %v790 = vld [vmem:[%s789] sm:$0xf]
        %v791 = vld [vmem:[%s789 + $0x4] sm:$0xf]
        %v792 = vld [vmem:[%s789 + $0x8] sm:$0xf]
        %v793 = vld [vmem:[%s789 + $0xc] sm:$0xf]
        %v794 = vld [vmem:[%s789 + $0x10] sm:$0xf]
        %v795 = vld [vmem:[%s789 + $0x14] sm:$0xf]
        %v796 = vld [vmem:[%s789 + $0x18] sm:$0xf]
        %v797 = vld [vmem:[%s789 + $0x1c] sm:$0xf]
        %v798 = vld [vmem:[%s789 + $0x20] sm:$0xf]
        %v799 = vld [vmem:[%s789 + $0x24] sm:$0xf]
        %v800 = vld [vmem:[%s789 + $0x28] sm:$0xf]
        %v801 = vld [vmem:[%s789 + $0x2c] sm:$0xf]
        %v802 = vld [vmem:[%s789 + $0x30] sm:$0xf]
        %v803 = vld [vmem:[%s789 + $0x34] sm:$0xf]
        %v804 = vld [vmem:[%s789 + $0x38] sm:$0xf]
        %v805 = vld [vmem:[%s789 + $0x3c] sm:$0xf]
        %v822 = vunpack.c.l.b16 %v790
        %v823 = vunpack.c.l.b16 %v791
        %v824 = vunpack.c.l.b16 %v792
        %v825 = vunpack.c.l.b16 %v793
        %v826 = vunpack.c.l.b16 %v794
        %v827 = vunpack.c.l.b16 %v795
        %v828 = vunpack.c.l.b16 %v796
        %v829 = vunpack.c.l.b16 %v797
        %v830 = vunpack.c.l.b16 %v798
        %v831 = vunpack.c.l.b16 %v799
        %v832 = vunpack.c.l.b16 %v800
        %v833 = vunpack.c.l.b16 %v801
        %v834 = vunpack.c.l.b16 %v802
        %v835 = vunpack.c.l.b16 %v803
        %v836 = vunpack.c.l.b16 %v804
        %v837 = vunpack.c.l.b16 %v805
        %v838 = vpack.c.b16 %v823, %v822
        %v839 = vpack.c.b16 %v825, %v824
        %v840 = vpack.c.b16 %v827, %v826
        %v841 = vpack.c.b16 %v829, %v828
        %v842 = vpack.c.b16 %v831, %v830
        %v843 = vpack.c.b16 %v833, %v832
        %v844 = vpack.c.b16 %v835, %v834
        %v845 = vpack.c.b16 %v837, %v836
        %854 = vmatprep.subr.bf16.mxu0 0
        %855 = vmatpush1.bf16.msra.mxu0 %v838
        %856 = vmatprep.subr.bf16.mxu0 0
        %857 = vmatpush1.bf16.msra.mxu0 %v839
        %858 = vmatprep.subr.bf16.mxu0 0
        %859 = vmatpush1.bf16.msra.mxu0 %v840
        %860 = vmatprep.subr.bf16.mxu0 0
        %861 = vmatpush1.bf16.msra.mxu0 %v841
        %862 = vmatprep.subr.bf16.mxu0 0
        %863 = vmatpush1.bf16.msra.mxu0 %v842
        %864 = vmatprep.subr.bf16.mxu0 0
        %865 = vmatpush1.bf16.msra.mxu0 %v843
        %866 = vmatprep.subr.bf16.mxu0 0
        %867 = vmatpush1.bf16.msra.mxu0 %v844
        %868 = vmatprep.subr.bf16.mxu0 0
        %869 = vmatpush1.bf16.msra.mxu0 %v845
        %870 = vmatprep.subr.bf16.mxu0 0
        %871 = vmatpush1.bf16.msra.mxu0 0
        %872 = vmatprep.subr.bf16.mxu0 0
        %873 = vmatpush1.bf16.msra.mxu0 0
        %874 = vmatprep.subr.bf16.mxu0 0
        %875 = vmatpush1.bf16.msra.mxu0 0
        %876 = vmatprep.subr.bf16.mxu0 0
        %877 = vmatpush1.bf16.msra.mxu0 0
        %878 = vmatprep.subr.bf16.mxu0 0
        %879 = vmatpush1.bf16.msra.mxu0 0
        %880 = vmatprep.subr.bf16.mxu0 0
        %881 = vmatpush1.bf16.msra.mxu0 0
        %882 = vmatprep.subr.bf16.mxu0 0
        %883 = vmatpush1.bf16.msra.mxu0 0
        %884 = vmatprep.subr.bf16.mxu0 0
        %885 = vmatpush1.bf16.msra.mxu0 0
        %886 = vmatprep.mubr.bf16.mxu0 0
        %887 = vmatmul.mubr.bf16.gmra.mrb[0].mxu0 %v788
        %v888 = vpop.f32.mrb[0].mxu0
        %v889 = vadd.f32 0.0, %v888
        %v890 = vpop.f32.mrb[0].mxu0
        %v891 = vpop.f32.mrb[0].mxu0
        %v892 = vadd.f32 0.0, %v891
        %v893 = vpop.f32.mrb[0].mxu0
        %894 = vdwg.mxu0
        %v895 = vadd.f32 %v780, %v889
        %v896 = vadd.f32 %v783, %v892
        %s897 = scalar_lea.vmem [#allocation8], 1
        %v898 = vld [vmem:[%s897] sm:$0x1]
        %v900 = vlaneseq
        %v901 = vshrl.u32 %v900, 7
        %v902 = vsub.s32 0, %v901
        %v903 = vrot.slane %v898, %v902
        %v905 = vadd.f32 %v895, %v903
        %v906 = vadd.f32 %v896, %v903
        %v907 = vadd.f32 %v905, %v568
        %v908 = vadd.f32 %v906, %v569
        %v909 = vpack.c.bf16 %v908, %v907
        %v911 = vunpack.c.l.b16 %v909
        %v912 = vunpack.c.h.b16 %v909
        %v913 = vpack.c.b16 %v911, %v911
        %v914 = vpack.c.b16 %v912, %v912
        %917 = vst [vmem:[%s217] sm:$0xf] %v913
        %918 = vst [vmem:[%s217 + $0x4] sm:$0xf] %v914
        %s919 = sand.u32 %s97, 1
        %s920 = scalar_lea.sflag [#allocation5], %s919
        %s921 = sand.u32 %s97, 1
        %s922 = smul.addr %s921, 8
        %s923 = scalar_lea.vmem [#allocation9], %s922
        // Predicated region
        $region45: #{tpu_custom_call.1} parent=31 // pred_check
          %p924 = pneg %p107
        $region46: #{tpu_custom_call.1} parent=31 // pred_check_branch
          %926 = sbr.rel (%p924) target = $region48
        $region47: #{tpu_custom_call.1} parent=31 // pred_region
          %s928 = ssub.s32 128, 128
          %929 = vsyncadd %s920, %s928
          %s930 = smul.addr %s21, 2
          %s931 = smul.addr %s930, 64
          %s932 = scalar_lea.hbm %s3, %s931
          %s933 = sshll.u32 %s923, 4
          %s934 = int_to_ptr.vmem [resolvable:$true] %s933
          %939 = dma.vmem_to_hbm [thread:$0]  %s934, 128, %s932, %s920, 64, 64, 4
        $region48: #{tpu_custom_call.1} parent=31 // pred_fallthru
          _
      $region32: #{tpu_custom_call.1} parent=5 // pred_fallthru
        _
      %p940 = scmp.le.s32.totalorder 2, %s16
      // Predicated region
      $region49: #{tpu_custom_call.1} parent=5 // pred_check
        %p941 = pneg %p940
      $region50: #{tpu_custom_call.1} parent=5 // pred_check_branch
        %943 = sbr.rel (%p941) target = $region52
      $region51: #{tpu_custom_call.1} parent=5 // pred_region
        %s944 = ssub.s32 %s16, 2
        // Predicated region
        $region53: #{tpu_custom_call.1} parent=51 // pred_check
          %p945 = pneg %p113
        $region54: #{tpu_custom_call.1} parent=51 // pred_check_branch
          %947 = sbr.rel (%p945) target = $region56
        $region55: #{tpu_custom_call.1} parent=51 // pred_region
          %s948 = sand.u32 %s98, 1
          %s949 = scalar_lea.sflag [#allocation5], %s948
          %s950 = sand.u32 %s98, 1
          %s951 = smul.addr %s950, 8
          %s952 = scalar_lea.vmem [#allocation9], %s951
          %953 = dma.done %s949, 128
        $region56: #{tpu_custom_call.1} parent=51 // pred_fallthru
          _
      $region52: #{tpu_custom_call.1} parent=5 // pred_fallthru
        _
    $region6: #{tpu_custom_call.1} parent=1 // loop_footer
      %s20 = sadd.s32 1, %s16
    $region7: #{tpu_custom_call.1} parent=1 // loop_footer_branch
      %15 = sbr.rel target = $region3
    $region8: #{tpu_custom_call.1} parent=1 // loop_exit
      _
    %954 = vsyncpa [#allocation4], 1
    %s955 = scalar_lea.sflag [#allocation4], 1
    %956 = vsyncpa %s955, 1
    %957 = vsyncpa [#allocation7], 1
    %958 = vsyncpa [#allocation5], 1
    %s959 = scalar_lea.sflag [#allocation5], 1
    %960 = vsyncpa %s959, 1

</llo_original>
